<compile_context>
chip_gen: v7x
topology: tpu7x:2x2x1
jax: 0.10.0
libtpu: 0.0.40
codegen_flags: <defaults>
</compile_context>

<pallas_src>
import functools

import jax
import jax.numpy as jnp
from jax.experimental import pallas as pl
from jax.experimental.pallas import tpu as pltpu


def _round_up(x, m):
    return (x + m - 1) // m * m


def _pad2d(x, rows, cols):
    r, c = x.shape
    if r == rows and c == cols:
        return x
    return jnp.pad(x, ((0, rows - r), (0, cols - c)))


def _mm_bias_act_kernel(a_ref, b_ref, bias_ref, o_ref, acc_ref, *, apply_relu):
    """o = A @ B + bias (+ ReLU), accumulated over the trailing K grid axis."""
    k = pl.program_id(2)

    @pl.when(k == 0)
    def _init():
        acc_ref[...] = jnp.zeros_like(acc_ref)

    # bf16 MXU inputs, f32 accumulation.
    acc_ref[...] += jnp.dot(a_ref[...], b_ref[...],
                            preferred_element_type=jnp.float32)

    @pl.when(k == pl.num_programs(2) - 1)
    def _finalize():
        out = acc_ref[...] + bias_ref[...]
        if apply_relu:
            out = jnp.maximum(out, 0.0)
        o_ref[...] = out.astype(o_ref.dtype)


def matmul_bias_act(a, b, bias=None, *, apply_relu=False,
                    tm=256, tn=256, tk=512):
    """Tiled (a @ b + bias) with optional ReLU.  a:[M,K] b:[K,N] bias:[1,N]."""
    m, k = a.shape
    k2, n = b.shape
    assert k == k2, (a.shape, b.shape)
    if bias is None:
        bias = jnp.zeros((1, n), jnp.float32)

    # Tile sizes: rows multiple of 8, lane dims multiple of 128 (or full dim).
    tm_eff = min(tm, _round_up(m, 8))
    tk_eff = min(tk, _round_up(k, 128))
    tn_eff = min(tn, _round_up(n, 128))
    m_pad = _round_up(m, tm_eff)
    k_pad = _round_up(k, tk_eff)
    n_pad = _round_up(n, tn_eff)

    a_p = _pad2d(a, m_pad, k_pad).astype(jnp.bfloat16)
    b_p = _pad2d(b, k_pad, n_pad).astype(jnp.bfloat16)
    bias_p = _pad2d(bias.astype(jnp.float32), 1, n_pad)

    grid = (m_pad // tm_eff, n_pad // tn_eff, k_pad // tk_eff)
    kernel = functools.partial(_mm_bias_act_kernel, apply_relu=apply_relu)

    out_p = pl.pallas_call(
        kernel,
        out_shape=jax.ShapeDtypeStruct((m_pad, n_pad), jnp.float32),
        grid_spec=pltpu.PrefetchScalarGridSpec(
            num_scalar_prefetch=0,
            grid=grid,
            in_specs=[
                pl.BlockSpec((tm_eff, tk_eff), lambda i, j, kk: (i, kk)),
                pl.BlockSpec((tk_eff, tn_eff), lambda i, j, kk: (kk, j)),
                pl.BlockSpec((1, tn_eff), lambda i, j, kk: (0, j)),
            ],
            out_specs=pl.BlockSpec((tm_eff, tn_eff), lambda i, j, kk: (i, j)),
            scratch_shapes=[pltpu.VMEM((tm_eff, tn_eff), jnp.float32)],
        ),
        compiler_params=pltpu.CompilerParams(
            dimension_semantics=("parallel", "parallel", "arbitrary"),
            vmem_limit_bytes=48 * 1024 * 1024,
        ),
    )(a_p, b_p, bias_p)
    return out_p[:m, :n]


def gcn_layer(a_hat, x, w, b, *, apply_relu):
    """One GCNConv: A_hat @ X @ W + b (+ ReLU), associated at the narrow width."""
    f_in, f_out = w.shape
    if f_in <= f_out:
        # Aggregate first at the narrower feature width: (A_hat @ X) @ W.
        ax = matmul_bias_act(a_hat, x)
        return matmul_bias_act(ax, w, b, apply_relu=apply_relu)
    else:
        # Transform first: A_hat @ (X @ W).
        xw = matmul_bias_act(x, w)
        return matmul_bias_act(a_hat, xw, b, apply_relu=apply_relu)


def build_norm_adj(edge_index, num_nodes):
    """Dense D^{-1/2} (A + I) D^{-1/2} from an edge_index of shape (2, E).

    Uses scatter-add (like torch_geometric's gcn_norm), so duplicate edges add.
    """
    src = edge_index[0]
    dst = edge_index[1]
    loops = jnp.arange(num_nodes, dtype=edge_index.dtype)
    src = jnp.concatenate([src, loops])
    dst = jnp.concatenate([dst, loops])
    # Row i of A aggregates messages from source nodes j (edges j -> i).
    a = jnp.zeros((num_nodes, num_nodes), jnp.float32).at[dst, src].add(1.0)
    deg = a.sum(axis=1)
    d_inv_sqrt = jnp.where(deg > 0.0, 1.0 / jnp.sqrt(deg), 0.0)
    return a * d_inv_sqrt[:, None] * d_inv_sqrt[None, :]


def glorot(key, shape):
    fan_in, fan_out = shape
    limit = jnp.sqrt(6.0 / (fan_in + fan_out))
    return jax.random.uniform(key, shape, jnp.float32, -limit, limit)


def init_gcn_params(key, in_channels, hidden_channels, out_channels):
    k1, k2 = jax.random.split(key)
    return {
        "w1": glorot(k1, (in_channels, hidden_channels)),
        "b1": jnp.zeros((1, hidden_channels), jnp.float32),
        "w2": glorot(k2, (hidden_channels, out_channels)),
        "b2": jnp.zeros((1, out_channels), jnp.float32),
    }


def gcn_forward(params, x, edge_index):
    n = x.shape[0]
    a_hat = build_norm_adj(edge_index, n)
    h = gcn_layer(a_hat, x, params["w1"], params["b1"], apply_relu=True)
    # F.dropout(p=0.5, training=False) -> identity in eval mode.
    out = gcn_layer(a_hat, h, params["w2"], params["b2"], apply_relu=False)
    return out


if __name__ == "__main__":
    key = jax.random.PRNGKey(0)
    k_feat, k_edge, k_param = jax.random.split(key, 3)

    num_nodes = 16
    in_channels = 8
    hidden_channels = 32
    out_channels = 6       # Citeseer has 6 classes
    num_edges = 40

    x = jax.random.normal(k_feat, (num_nodes, in_channels), jnp.float32)
    edge_index = jax.random.randint(
        k_edge, (2, num_edges), 0, num_nodes, dtype=jnp.int32)

    params = init_gcn_params(k_param, in_channels, hidden_channels, out_channels)

    out = gcn_forward(params, x, edge_index)
    jax.block_until_ready(out)

    assert out.shape == (num_nodes, out_channels)
    assert out.dtype == jnp.float32

    # Cross-check against a plain-JAX reference using the same math as the
    # kernels (bf16 MXU inputs, f32 accumulation, same association order).
    a_hat = build_norm_adj(edge_index, num_nodes)

    def _mm_ref(p, q):
        return jnp.dot(p.astype(jnp.bfloat16), q.astype(jnp.bfloat16),
                       preferred_element_type=jnp.float32)

    def _layer_ref(a, xx, w, bb, relu):
        f_in, f_out = w.shape
        if f_in <= f_out:
            o = _mm_ref(_mm_ref(a, xx), w) + bb
        else:
            o = _mm_ref(a, _mm_ref(xx, w)) + bb
        return jnp.maximum(o, 0.0) if relu else o

    h_ref = _layer_ref(a_hat, x, params["w1"], params["b1"], True)
    out_ref = _layer_ref(a_hat, h_ref, params["w2"], params["b2"], False)
    assert jnp.allclose(out, out_ref, atol=1e-3, rtol=1e-3), (
        float(jnp.max(jnp.abs(out - out_ref))))

    # Exercise the multi-tile / K-accumulation path with deliberately small
    # tiles (grid > 1 on every axis).
    ka, kb = jax.random.split(jax.random.PRNGKey(1))
    ta = jax.random.normal(ka, (48, 320), jnp.float32)
    tb = jax.random.normal(kb, (320, 192), jnp.float32)
    tbias = jax.random.normal(jax.random.PRNGKey(2), (1, 192), jnp.float32)
    tout = matmul_bias_act(ta, tb, tbias, apply_relu=True,
                           tm=16, tn=128, tk=128)
    tref = jnp.maximum(_mm_ref(ta, tb) + tbias, 0.0)
    assert tout.shape == (48, 192)
    assert jnp.allclose(tout, tref, atol=5e-3, rtol=5e-3), (
        float(jnp.max(jnp.abs(tout - tref))))

    print("KERNEL_OK")
</pallas_src>

<mosaic_0001>
module attributes {stable_mosaic.version = 11 : i64} {
  func.func @_mm_bias_act_kernel(%arg0: i32, %arg1: i32, %arg2: i32, %arg3: memref<16x128xbf16, #tpu.memory_space<vmem>>, %arg4: memref<128x128xbf16, #tpu.memory_space<vmem>>, %arg5: memref<1x128xf32, #tpu.memory_space<vmem>>, %arg6: memref<16x128xf32, #tpu.memory_space<vmem>>, %arg7: memref<16x128xf32, #tpu.memory_space<vmem>>) attributes {dimension_semantics = [#tpu.dimension_semantics<parallel>, #tpu.dimension_semantics<parallel>, #tpu.dimension_semantics<arbitrary>], iteration_bounds = array<i64: 1, 1, 1>, scalar_prefetch = 0 : i64, scratch_operands = 1 : i64, tpu.core_type = #tpu.core_type<tc>, window_params = [{transform_indices = @transform_0, window_bounds = array<i64: 16, 128>}, {transform_indices = @transform_1, window_bounds = array<i64: 128, 128>}, {transform_indices = @transform_2, window_bounds = array<i64: 1, 128>}, {transform_indices = @transform_3, window_bounds = array<i64: 16, 128>}]} {
    %c0_i32 = arith.constant 0 : i32
    %0 = arith.cmpi eq, %arg2, %c0_i32 : i32
    %1 = arith.extui %0 : i1 to i32
    %c0_i32_0 = arith.constant 0 : i32
    %2 = arith.cmpi ne, %1, %c0_i32_0 : i32
    scf.if %2 {
      %cst_10 = arith.constant 0.000000e+00 : f32
      %12 = vector.broadcast %cst_10 : f32 to vector<16x128xf32>
      %c0_11 = arith.constant 0 : index
      %c0_12 = arith.constant 0 : index
      %13 = vector.load %arg7[%c0_11, %c0_12] : memref<16x128xf32, #tpu.memory_space<vmem>>, vector<16x128xf32>
      tpu.vector_store %arg7[%c0_11, %c0_12], %12 {strides = array<i32>} : memref<16x128xf32, #tpu.memory_space<vmem>>, vector<16x128xf32>,
    } else {
    }
    %c0 = arith.constant 0 : index
    %c0_1 = arith.constant 0 : index
    %3 = vector.load %arg7[%c0, %c0_1] : memref<16x128xf32, #tpu.memory_space<vmem>>, vector<16x128xf32>
    %c0_2 = arith.constant 0 : index
    %c0_3 = arith.constant 0 : index
    %4 = vector.load %arg3[%c0_2, %c0_3] : memref<16x128xbf16, #tpu.memory_space<vmem>>, vector<16x128xbf16>
    %c0_4 = arith.constant 0 : index
    %c0_5 = arith.constant 0 : index
    %5 = vector.load %arg4[%c0_4, %c0_5] : memref<128x128xbf16, #tpu.memory_space<vmem>>, vector<128x128xbf16>
    %cst = arith.constant dense<0.000000e+00> : vector<16x128xf32>
    %6 = tpu.matmul %4, %5, %cst {dimension_numbers = #tpu.dot_dimension_numbers<[1], [0], [0], [1], [0, 0, 1, 1], [], []>} : vector<16x128xbf16>, vector<128x128xbf16>, vector<16x128xf32> -> vector<16x128xf32>
    %7 = arith.addf %3, %6 : vector<16x128xf32>
    %c0_6 = arith.constant 0 : index
    %c0_7 = arith.constant 0 : index
    %8 = vector.load %arg7[%c0_6, %c0_7] : memref<16x128xf32, #tpu.memory_space<vmem>>, vector<16x128xf32>
    tpu.vector_store %arg7[%c0_6, %c0_7], %7 {strides = array<i32>} : memref<16x128xf32, #tpu.memory_space<vmem>>, vector<16x128xf32>,
    %c0_i32_8 = arith.constant 0 : i32
    %9 = arith.cmpi eq, %arg2, %c0_i32_8 : i32
    %10 = arith.extui %9 : i1 to i32
    %c0_i32_9 = arith.constant 0 : i32
    %11 = arith.cmpi ne, %10, %c0_i32_9 : i32
    scf.if %11 {
      %c0_10 = arith.constant 0 : index
      %c0_11 = arith.constant 0 : index
      %12 = vector.load %arg7[%c0_10, %c0_11] : memref<16x128xf32, #tpu.memory_space<vmem>>, vector<16x128xf32>
      %c0_12 = arith.constant 0 : index
      %c0_13 = arith.constant 0 : index
      %13 = vector.load %arg5[%c0_12, %c0_13] : memref<1x128xf32, #tpu.memory_space<vmem>>, vector<1x128xf32>
      %14 = vector.broadcast %13 : vector<1x128xf32> to vector<16x128xf32>
      %15 = arith.addf %12, %14 : vector<16x128xf32>
      %c0_14 = arith.constant 0 : index
      %c0_15 = arith.constant 0 : index
      %16 = vector.load %arg6[%c0_14, %c0_15] : memref<16x128xf32, #tpu.memory_space<vmem>>, vector<16x128xf32>
      tpu.vector_store %arg6[%c0_14, %c0_15], %15 {strides = array<i32>} : memref<16x128xf32, #tpu.memory_space<vmem>>, vector<16x128xf32>,
    } else {
    }
    return
  }
  func.func @transform_0(%arg0: i32, %arg1: i32, %arg2: i32) -> (i32, i32) {
    %c0_i32 = arith.constant 0 : i32
    return %arg0, %arg2 : i32, i32
  }
  func.func @transform_1(%arg0: i32, %arg1: i32, %arg2: i32) -> (i32, i32) {
    %c0_i32 = arith.constant 0 : i32
    return %arg2, %arg1 : i32, i32
  }
  func.func @transform_2(%arg0: i32, %arg1: i32, %arg2: i32) -> (i32, i32) {
    %c0_i32 = arith.constant 0 : i32
    %c0_i32_0 = arith.constant 0 : i32
    return %c0_i32, %arg1 : i32, i32
  }
  func.func @transform_3(%arg0: i32, %arg1: i32, %arg2: i32) -> (i32, i32) {
    %c0_i32 = arith.constant 0 : i32
    return %arg0, %arg1 : i32, i32
  }
}

</mosaic_0001>

<llo_original>
// kernel: tpu_custom_call.1
$region0: #{tpu_custom_call.1}
  #allocation0 [shape = 'u32[]', space=smem, size = 0x4, offset = 0x4, fixed_abs, tag = 'smem constant byte address 0x4 - core index']
  #allocation1 [shape = 'u32[144,128]{1,0:T(1,128)}', space=vmem, size = 0x12000, scoped, tag = 'internal scratch']
  #allocation2 [shape = 'f32[16,128]{1,0:T(8,128)}', space=vmem, size = 0x2000, scoped, tag = 'scratch operand']
  %s0 = inlined_call_operand.hbm [shape: bf16[16,128], index: 0, kind: input, shape index: {}]
  %s1 = inlined_call_operand.hbm [shape: bf16[128,128], index: 1, kind: input, shape index: {}]
  %s2 = inlined_call_operand.vmem [shape: f32[1,128], index: 2, kind: input, shape index: {}]
  %s3 = inlined_call_operand.hbm [shape: f32[16,128], index: 3, kind: output, shape index: {}]
  %s4 = sld [smem:[#allocation0]]
  $region38: #{tpu_custom_call.1} parent=0
    _
  %s6 = ssub.s32 1, %s4
  %s7 = scalar_select 0, %s6, %s4
  $region1: #{tpu_custom_call.1} parent=0
    #allocation3 [shape = 'u8[4096]{0}', space=vmem, size = 0x1000, scoped, tag = 'input window, operand 0, single buffered']
    #allocation4 [shape = 's32[1]{0}', space=sflag, size = 0x4, scoped, tag = 'scoped memory for tpu_custom_call.1']
    #allocation5 [shape = 's32[1]{0}', space=sflag, size = 0x4, scoped, tag = 'scoped memory for tpu_custom_call.1']
    #allocation6 [shape = 'u8[32768]{0}', space=vmem, size = 0x8000, scoped, tag = 'input window, operand 1, single buffered']
    #allocation7 [shape = 's32[1]{0}', space=sflag, size = 0x4, scoped, tag = 'scoped memory for tpu_custom_call.1']
    #allocation8 [shape = 'u8[8192]{0}', space=vmem, size = 0x2000, scoped, tag = 'output window, operand 0, single buffered']
    %8 = vsyncpa [#allocation4], 0
    %9 = vsyncpa [#allocation7], 0
    %10 = vsyncpa [#allocation5], 0
    // Predicated region
    $region2: #{tpu_custom_call.1} parent=1 // pred_check
      _
    $region3: #{tpu_custom_call.1} parent=1 // pred_check_branch
      %12 = sbr.rel (0) target = $region5
    $region4: #{tpu_custom_call.1} parent=1 // pred_region
      %s14 = ssub.s32 128, 128
      %15 = vsyncadd [#allocation4], %s14
      %s16 = sshll.u32 [#allocation3], 4
      %s17 = int_to_ptr.vmem [resolvable:$true] %s16
      %22 = dma.hbm_to_vmem [thread:$0]  %s0, 128, %s17, [#allocation4], 64, 64, 4
    $region5: #{tpu_custom_call.1} parent=1 // pred_fallthru
      _
    // Predicated region
    $region6: #{tpu_custom_call.1} parent=1 // pred_check
      _
    $region7: #{tpu_custom_call.1} parent=1 // pred_check_branch
      %24 = sbr.rel (0) target = $region9
    $region8: #{tpu_custom_call.1} parent=1 // pred_region
      %s26 = ssub.s32 1024, 1024
      %27 = vsyncadd [#allocation7], %s26
      %s28 = sshll.u32 [#allocation6], 4
      %s29 = int_to_ptr.vmem [resolvable:$true] %s28
      %34 = dma.hbm_to_vmem [thread:$0]  %s1, 1024, %s29, [#allocation7], 64, 64, 4
    $region9: #{tpu_custom_call.1} parent=1 // pred_fallthru
      _
    // Predicated region
    $region10: #{tpu_custom_call.1} parent=1 // pred_check
      _
    $region11: #{tpu_custom_call.1} parent=1 // pred_check_branch
      %36 = sbr.rel (0) target = $region13
    $region12: #{tpu_custom_call.1} parent=1 // pred_region
      _
    $region13: #{tpu_custom_call.1} parent=1 // pred_fallthru
      _
    // Predicated region
    $region14: #{tpu_custom_call.1} parent=1 // pred_check
      _
    $region15: #{tpu_custom_call.1} parent=1 // pred_check_branch
      %38 = sbr.rel (0) target = $region17
    $region16: #{tpu_custom_call.1} parent=1 // pred_region
      %39 = dma.done [#allocation4], 128
    $region17: #{tpu_custom_call.1} parent=1 // pred_fallthru
      _
    // Predicated region
    $region18: #{tpu_custom_call.1} parent=1 // pred_check
      _
    $region19: #{tpu_custom_call.1} parent=1 // pred_check_branch
      %41 = sbr.rel (0) target = $region21
    $region20: #{tpu_custom_call.1} parent=1 // pred_region
      %42 = dma.done [#allocation7], 1024
    $region21: #{tpu_custom_call.1} parent=1 // pred_fallthru
      _
    %p44 = scmp.eq.s32.totalorder 0, 0
    // Predicated region
    $region22: #{tpu_custom_call.1} parent=1 // pred_check
      %p45 = pneg %p44
    $region23: #{tpu_custom_call.1} parent=1 // pred_check_branch
      %47 = sbr.rel (%p45) target = $region25
    $region24: #{tpu_custom_call.1} parent=1 // pred_region
      %48 = vst [vmem:[#allocation2] sm:$0xff] 0.0
      %49 = vst [vmem:[#allocation2 + $0x8] sm:$0xff] 0.0
    $region25: #{tpu_custom_call.1} parent=1 // pred_fallthru
      _
    %v50 = vld [vmem:[#allocation2] sm:$0xff]
    %v51 = vld [vmem:[#allocation2 + $0x8] sm:$0xff]
    %v52 = vld [vmem:[#allocation3] sm:$0xf]
    %v53 = vld [vmem:[#allocation3 + $0x4] sm:$0xf]
    %v54 = vld [vmem:[#allocation6] sm:$0xf]
    %v55 = vld [vmem:[#allocation6 + $0x4] sm:$0xf]
    %v56 = vld [vmem:[#allocation6 + $0x8] sm:$0xf]
    %v57 = vld [vmem:[#allocation6 + $0xc] sm:$0xf]
    %v58 = vld [vmem:[#allocation6 + $0x10] sm:$0xf]
    %v59 = vld [vmem:[#allocation6 + $0x14] sm:$0xf]
    %v60 = vld [vmem:[#allocation6 + $0x18] sm:$0xf]
    %v61 = vld [vmem:[#allocation6 + $0x1c] sm:$0xf]
    %v62 = vld [vmem:[#allocation6 + $0x20] sm:$0xf]
    %v63 = vld [vmem:[#allocation6 + $0x24] sm:$0xf]
    %v64 = vld [vmem:[#allocation6 + $0x28] sm:$0xf]
    %v65 = vld [vmem:[#allocation6 + $0x2c] sm:$0xf]
    %v66 = vld [vmem:[#allocation6 + $0x30] sm:$0xf]
    %v67 = vld [vmem:[#allocation6 + $0x34] sm:$0xf]
    %v68 = vld [vmem:[#allocation6 + $0x38] sm:$0xf]
    %v69 = vld [vmem:[#allocation6 + $0x3c] sm:$0xf]
    %v72 = vunpack.c.l.b16 %v52
    %v73 = vunpack.c.l.b16 %v53
    %v74 = vpack.c.b16 %v73, %v72
    %v92 = vunpack.c.l.b16 %v54
    %v93 = vunpack.c.l.b16 %v55
    %v94 = vunpack.c.l.b16 %v56
    %v95 = vunpack.c.l.b16 %v57
    %v96 = vunpack.c.l.b16 %v58
    %v97 = vunpack.c.l.b16 %v59
    %v98 = vunpack.c.l.b16 %v60
    %v99 = vunpack.c.l.b16 %v61
    %v100 = vunpack.c.l.b16 %v62
    %v101 = vunpack.c.l.b16 %v63
    %v102 = vunpack.c.l.b16 %v64
    %v103 = vunpack.c.l.b16 %v65
    %v104 = vunpack.c.l.b16 %v66
    %v105 = vunpack.c.l.b16 %v67
    %v106 = vunpack.c.l.b16 %v68
    %v107 = vunpack.c.l.b16 %v69
    %v108 = vpack.c.b16 %v93, %v92
    %v109 = vpack.c.b16 %v95, %v94
    %v110 = vpack.c.b16 %v97, %v96
    %v111 = vpack.c.b16 %v99, %v98
    %v112 = vpack.c.b16 %v101, %v100
    %v113 = vpack.c.b16 %v103, %v102
    %v114 = vpack.c.b16 %v105, %v104
    %v115 = vpack.c.b16 %v107, %v106
    %124 = vmatprep.subr.bf16.mxu0 0
    %125 = vmatpush1.bf16.msra.mxu0 %v108
    %126 = vmatprep.subr.bf16.mxu0 0
    %127 = vmatpush1.bf16.msra.mxu0 %v109
    %128 = vmatprep.subr.bf16.mxu0 0
    %129 = vmatpush1.bf16.msra.mxu0 %v110
    %130 = vmatprep.subr.bf16.mxu0 0
    %131 = vmatpush1.bf16.msra.mxu0 %v111
    %132 = vmatprep.subr.bf16.mxu0 0
    %133 = vmatpush1.bf16.msra.mxu0 %v112
    %134 = vmatprep.subr.bf16.mxu0 0
    %135 = vmatpush1.bf16.msra.mxu0 %v113
    %136 = vmatprep.subr.bf16.mxu0 0
    %137 = vmatpush1.bf16.msra.mxu0 %v114
    %138 = vmatprep.subr.bf16.mxu0 0
    %139 = vmatpush1.bf16.msra.mxu0 %v115
    %140 = vmatprep.subr.bf16.mxu0 0
    %141 = vmatpush1.bf16.msra.mxu0 0
    %142 = vmatprep.subr.bf16.mxu0 0
    %143 = vmatpush1.bf16.msra.mxu0 0
    %144 = vmatprep.subr.bf16.mxu0 0
    %145 = vmatpush1.bf16.msra.mxu0 0
    %146 = vmatprep.subr.bf16.mxu0 0
    %147 = vmatpush1.bf16.msra.mxu0 0
    %148 = vmatprep.subr.bf16.mxu0 0
    %149 = vmatpush1.bf16.msra.mxu0 0
    %150 = vmatprep.subr.bf16.mxu0 0
    %151 = vmatpush1.bf16.msra.mxu0 0
    %152 = vmatprep.subr.bf16.mxu0 0
    %153 = vmatpush1.bf16.msra.mxu0 0
    %154 = vmatprep.subr.bf16.mxu0 0
    %155 = vmatpush1.bf16.msra.mxu0 0
    %156 = vmatprep.mubr.bf16.mxu0 0
    %157 = vmatmul.mubr.bf16.gmra.mrb[0].mxu0 %v74
    %v158 = vpop.f32.mrb[0].mxu0
    %v159 = vadd.f32 0.0, %v158
    %v160 = vpop.f32.mrb[0].mxu0
    %v161 = vpop.f32.mrb[0].mxu0
    %v162 = vadd.f32 0.0, %v161
    %v163 = vpop.f32.mrb[0].mxu0
    %164 = vdwg.mxu0
    %v165 = vadd.f32 %v50, %v159
    %v166 = vadd.f32 %v51, %v162
    %167 = vst [vmem:[#allocation2] sm:$0xff] %v165
    %168 = vst [vmem:[#allocation2 + $0x8] sm:$0xff] %v166
    // Predicated region
    $region26: #{tpu_custom_call.1} parent=1 // pred_check
      %p169 = pneg %p44
    $region27: #{tpu_custom_call.1} parent=1 // pred_check_branch
      %171 = sbr.rel (%p169) target = $region29
    $region28: #{tpu_custom_call.1} parent=1 // pred_region
      %v172 = vld [vmem:[#allocation2] sm:$0xff]
      %v173 = vld [vmem:[#allocation2 + $0x8] sm:$0xff]
      %v174 = vld [vmem:[%s2] sm:$0x1]
      %v176 = vlaneseq
      %v177 = vshrl.u32 %v176, 7
      %v178 = vsub.s32 0, %v177
      %v179 = vrot.slane %v174, %v178
      %v181 = vadd.f32 %v172, %v179
      %v182 = vadd.f32 %v173, %v179
      %183 = vst [vmem:[#allocation8] sm:$0xff] %v181
      %184 = vst [vmem:[#allocation8 + $0x8] sm:$0xff] %v182
    $region29: #{tpu_custom_call.1} parent=1 // pred_fallthru
      _
    // Predicated region
    $region30: #{tpu_custom_call.1} parent=1 // pred_check
      _
    $region31: #{tpu_custom_call.1} parent=1 // pred_check_branch
      %186 = sbr.rel (0) target = $region33
    $region32: #{tpu_custom_call.1} parent=1 // pred_region
      %s188 = ssub.s32 256, 256
      %189 = vsyncadd [#allocation5], %s188
      %s190 = sshll.u32 [#allocation8], 4
      %s191 = int_to_ptr.vmem [resolvable:$true] %s190
      %196 = dma.vmem_to_hbm [thread:$0]  %s191, 256, %s3, [#allocation5], 128, 128, 8
    $region33: #{tpu_custom_call.1} parent=1 // pred_fallthru
      _
    // Predicated region
    $region34: #{tpu_custom_call.1} parent=1 // pred_check
      _
    $region35: #{tpu_custom_call.1} parent=1 // pred_check_branch
      %198 = sbr.rel (0) target = $region37
    $region36: #{tpu_custom_call.1} parent=1 // pred_region
      %199 = dma.done [#allocation5], 256
    $region37: #{tpu_custom_call.1} parent=1 // pred_fallthru
      _
    %200 = vsyncpa [#allocation4], 1
    %201 = vsyncpa [#allocation7], 1
    %202 = vsyncpa [#allocation5], 1

</llo_original>
